<compile_context>
chip_gen: v7x
topology: tpu7x:2x2x1
jax: 0.10.0
libtpu: 0.0.40
codegen_flags: <defaults>
</compile_context>

<pallas_src>
import jax
import jax.numpy as jnp
from jax.experimental import pallas as pl
from jax.experimental.pallas import tpu as pltpu


# ----------------------------------------------------------------------------
# Fused kernel: conv (single im2col matmul) + BatchNorm2d(train stats) + ReLU.
# ----------------------------------------------------------------------------
def fused_conv_bn_relu_kernel(p_ref, w_ref, gb_ref, o_ref):
    # p_ref:  (K, N*M)     im2col patches, K = 9*Cin, M = H*W (lane dim = N*M)
    # w_ref:  (Cout, K)    conv weight, row = output channel
    # gb_ref: (Cout, 2)    column 0 = gamma, column 1 = beta
    # o_ref:  (N, Cout, M) lane-dense output (last dim = 256)
    n_batch = o_ref.shape[0]
    m = o_ref.shape[2]
    nm = p_ref.shape[1]

    # Conv for the whole batch: one (Cout,K)x(K,N*M) MXU matmul.
    y = jnp.dot(w_ref[...], p_ref[...],
                preferred_element_type=jnp.float32)          # (Cout, N*M)

    # BatchNorm2d training statistics over (N, H, W) == the N*M lane axis.
    inv_cnt = 1.0 / float(nm)
    mean = jnp.sum(y, axis=1, keepdims=True) * inv_cnt        # (Cout, 1)
    centered = y - mean
    var = jnp.sum(centered * centered, axis=1, keepdims=True) * inv_cnt  # biased
    inv_std = jax.lax.rsqrt(var + 1e-5)

    gamma = gb_ref[:, 0:1]                                    # (Cout, 1)
    beta = gb_ref[:, 1:2]                                     # (Cout, 1)
    out = jnp.maximum(centered * (gamma * inv_std) + beta, 0.0)  # (Cout, N*M)

    # Static, lane-aligned (multiple-of-128) slices back into (N, Cout, M).
    for n in range(n_batch):
        o_ref[n] = out[:, n * m:(n + 1) * m].astype(o_ref.dtype)


# ----------------------------------------------------------------------------
# Wrapper: BasicCell forward = ReLU(BN(Conv2d(x))), NCHW in / NCHW out.
# ----------------------------------------------------------------------------
@jax.jit
def basic_cell_forward(x_nchw, w_oihw, gamma, beta):
    N, Cin, H, W = x_nchw.shape
    Cout = w_oihw.shape[0]
    K = 9 * Cin
    M = H * W

    x = x_nchw.astype(jnp.float32)
    xp = jnp.pad(x, ((0, 0), (0, 0), (1, 1), (1, 1)))         # pad=1 on H, W

    # im2col in the wrapper (tiny: 36*512*4B = 72 KB).
    # patches[(kh*3+kw)*Cin + ci, n*M + h*W + w] = xp[n, ci, h+kh, w+kw]
    taps = [xp[:, :, kh:kh + H, kw:kw + W]
            for kh in range(3) for kw in range(3)]            # each (N,Cin,H,W)
    patches = (jnp.concatenate(taps, axis=1)                  # (N, K, H, W)
               .transpose(1, 0, 2, 3)                         # (K, N, H, W)
               .reshape(K, N * M))

    # Torch OIHW (Cout,Cin,3,3) -> (Cout, 9*Cin) with k ordered (kh, kw, cin)
    # to match the patch ordering above.
    w2 = jnp.transpose(w_oihw, (0, 2, 3, 1)).reshape(Cout, K).astype(jnp.float32)

    # gamma/beta merged into one small slab -> one fewer input DMA.
    gb = jnp.stack([gamma.astype(jnp.float32),
                    beta.astype(jnp.float32)], axis=1)        # (Cout, 2)

    out = pl.pallas_call(
        fused_conv_bn_relu_kernel,
        out_shape=jax.ShapeDtypeStruct((N, Cout, M), jnp.float32),
        in_specs=[
            pl.BlockSpec(memory_space=pltpu.MemorySpace.VMEM),   # patches
            pl.BlockSpec(memory_space=pltpu.MemorySpace.VMEM),   # weight
            pl.BlockSpec(memory_space=pltpu.MemorySpace.VMEM),   # gamma|beta
        ],
        out_specs=pl.BlockSpec(memory_space=pltpu.MemorySpace.VMEM),
    )(patches, w2, gb)

    # (N, Cout, H*W) -> (N, Cout, H, W): pure reshape, no transpose.
    return out.reshape(N, Cout, H, W)


# ----------------------------------------------------------------------------
# Pure-JAX reference (silent self-check).
# ----------------------------------------------------------------------------
def reference_forward(x_nchw, w_oihw, gamma, beta):
    conv = jax.lax.conv_general_dilated(
        x_nchw.astype(jnp.float32), w_oihw.astype(jnp.float32),
        window_strides=(1, 1), padding=((1, 1), (1, 1)),
        dimension_numbers=("NCHW", "OIHW", "NCHW"))
    mean = jnp.mean(conv, axis=(0, 2, 3), keepdims=True)
    var = jnp.mean((conv - mean) ** 2, axis=(0, 2, 3), keepdims=True)
    yhat = (conv - mean) * jax.lax.rsqrt(var + 1e-5)
    yhat = yhat * gamma.reshape(1, -1, 1, 1) + beta.reshape(1, -1, 1, 1)
    return jnp.maximum(yhat, 0.0)


if __name__ == "__main__":
    # BasicCell cell_info (implied defaults): mode='Conv2d', kernel_size=3,
    # stride=1, padding=1, dilation=1, groups=1, bias=False,
    # normalization='bn', activation='relu', input_size=4, output_size=8.
    N, Cin, Cout, H, W = 2, 4, 8, 16, 16

    key = jax.random.PRNGKey(0)
    kx, kw = jax.random.split(key)
    x = jax.random.normal(kx, (N, Cin, H, W), dtype=jnp.float32)
    # Conv weight in PyTorch OIHW layout, roughly kaiming-scale.
    w_oihw = jax.random.normal(kw, (Cout, Cin, 3, 3), dtype=jnp.float32) * 0.1
    # BatchNorm2d default affine init: gamma=1, beta=0.
    gamma = jnp.ones((Cout,), dtype=jnp.float32)
    beta = jnp.zeros((Cout,), dtype=jnp.float32)

    out = jax.block_until_ready(basic_cell_forward(x, w_oihw, gamma, beta))

    ref = reference_forward(x, w_oihw, gamma, beta)
    assert out.shape == (N, Cout, H, W)
    assert jnp.allclose(out, ref, atol=1e-4, rtol=1e-4)

    print("KERNEL_OK")
</pallas_src>

<mosaic_0001>
module attributes {stable_mosaic.version = 11 : i64} {
  func.func @fused_conv_bn_relu_kernel(%arg0: memref<36x512xf32, #tpu.memory_space<vmem>>, %arg1: memref<8x36xf32, #tpu.memory_space<vmem>>, %arg2: memref<8x2xf32, #tpu.memory_space<vmem>>, %arg3: memref<2x8x256xf32, #tpu.memory_space<vmem>>) attributes {dimension_semantics = [], scalar_prefetch = 0 : i64, scratch_operands = 0 : i64, tpu.core_type = #tpu.core_type<tc>} {
    %c0 = arith.constant 0 : index
    %c0_0 = arith.constant 0 : index
    %0 = vector.load %arg1[%c0, %c0_0] : memref<8x36xf32, #tpu.memory_space<vmem>>, vector<8x36xf32>
    %c0_1 = arith.constant 0 : index
    %c0_2 = arith.constant 0 : index
    %1 = vector.load %arg0[%c0_1, %c0_2] : memref<36x512xf32, #tpu.memory_space<vmem>>, vector<36x512xf32>
    %cst = arith.constant dense<0.000000e+00> : vector<8x512xf32>
    %2 = tpu.matmul %0, %1, %cst {dimension_numbers = #tpu.dot_dimension_numbers<[1], [0], [0], [1], [0, 0, 1, 1], [], []>} : vector<8x36xf32>, vector<36x512xf32>, vector<8x512xf32> -> vector<8x512xf32>
    %cst_3 = arith.constant dense<0.000000e+00> : vector<8xf32>
    %3 = vector.multi_reduction <add>, %2, %cst_3 [1] : vector<8x512xf32> to vector<8xf32>
    %4 = vector.shape_cast %3 : vector<8xf32> to vector<8x1xf32>
    %cst_4 = arith.constant 0.001953125 : f32
    %5 = vector.broadcast %cst_4 : f32 to vector<8x1xf32>
    %6 = arith.mulf %4, %5 : vector<8x1xf32>
    %7 = vector.broadcast %6 : vector<8x1xf32> to vector<8x512xf32>
    %8 = arith.subf %2, %7 : vector<8x512xf32>
    %9 = arith.mulf %8, %8 : vector<8x512xf32>
    %cst_5 = arith.constant dense<0.000000e+00> : vector<8xf32>
    %10 = vector.multi_reduction <add>, %9, %cst_5 [1] : vector<8x512xf32> to vector<8xf32>
    %11 = vector.shape_cast %10 : vector<8xf32> to vector<8x1xf32>
    %cst_6 = arith.constant 0.001953125 : f32
    %12 = vector.broadcast %cst_6 : f32 to vector<8x1xf32>
    %13 = arith.mulf %11, %12 : vector<8x1xf32>
    %cst_7 = arith.constant 9.99999974E-6 : f32
    %14 = vector.broadcast %cst_7 : f32 to vector<8x1xf32>
    %15 = arith.addf %13, %14 : vector<8x1xf32>
    %16 = math.rsqrt %15 : vector<8x1xf32>
    %c0_8 = arith.constant 0 : index
    %c0_9 = arith.constant 0 : index
    %17 = vector.load %arg2[%c0_8, %c0_9] : memref<8x2xf32, #tpu.memory_space<vmem>>, vector<8x1xf32>
    %c0_10 = arith.constant 0 : index
    %c1 = arith.constant 1 : index
    %18 = vector.load %arg2[%c0_10, %c1] : memref<8x2xf32, #tpu.memory_space<vmem>>, vector<8x1xf32>
    %19 = arith.mulf %17, %16 : vector<8x1xf32>
    %20 = vector.broadcast %19 : vector<8x1xf32> to vector<8x512xf32>
    %21 = arith.mulf %8, %20 : vector<8x512xf32>
    %22 = vector.broadcast %18 : vector<8x1xf32> to vector<8x512xf32>
    %23 = arith.addf %21, %22 : vector<8x512xf32>
    %cst_11 = arith.constant 0.000000e+00 : f32
    %24 = vector.broadcast %cst_11 : f32 to vector<8x512xf32>
    %25 = arith.maximumf %23, %24 : vector<8x512xf32>
    %26 = vector.extract_strided_slice %25 {offsets = [0, 0], sizes = [8, 256], strides = [1, 1]} : vector<8x512xf32> to vector<8x256xf32>
    %c0_12 = arith.constant 0 : index
    %c0_13 = arith.constant 0 : index
    %c0_14 = arith.constant 0 : index
    %27 = vector.load %arg3[%c0_12, %c0_13, %c0_14] : memref<2x8x256xf32, #tpu.memory_space<vmem>>, vector<1x8x256xf32>
    %28 = vector.shape_cast %27 : vector<1x8x256xf32> to vector<8x256xf32>
    %29 = vector.shape_cast %26 : vector<8x256xf32> to vector<1x8x256xf32>
    tpu.vector_store %arg3[%c0_12, %c0_13, %c0_14], %29 {strides = array<i32>} : memref<2x8x256xf32, #tpu.memory_space<vmem>>, vector<1x8x256xf32>,
    %30 = vector.extract_strided_slice %25 {offsets = [0, 256], sizes = [8, 256], strides = [1, 1]} : vector<8x512xf32> to vector<8x256xf32>
    %c1_15 = arith.constant 1 : index
    %c0_16 = arith.constant 0 : index
    %c0_17 = arith.constant 0 : index
    %31 = vector.load %arg3[%c1_15, %c0_16, %c0_17] : memref<2x8x256xf32, #tpu.memory_space<vmem>>, vector<1x8x256xf32>
    %32 = vector.shape_cast %31 : vector<1x8x256xf32> to vector<8x256xf32>
    %33 = vector.shape_cast %30 : vector<8x256xf32> to vector<1x8x256xf32>
    tpu.vector_store %arg3[%c1_15, %c0_16, %c0_17], %33 {strides = array<i32>} : memref<2x8x256xf32, #tpu.memory_space<vmem>>, vector<1x8x256xf32>,
    return
  }
}

</mosaic_0001>

<llo_original>
// kernel: basic_cell_forward.1
$region0: #{basic_cell_forward.1}
  #allocation0 [shape = 'u32[]', space=smem, size = 0x4, offset = 0x4, fixed_abs, tag = 'smem constant byte address 0x4 - core index']
  #allocation1 [shape = 'u32[144,128]{1,0:T(1,128)}', space=vmem, size = 0x12000, scoped, tag = 'internal scratch']
  %s0 = inlined_call_operand.vmem [shape: f32[36,512], index: 0, kind: input, shape index: {}]
  %s1 = inlined_call_operand.vmem [shape: f32[8,36], index: 1, kind: input, shape index: {}]
  %s2 = inlined_call_operand.vmem [shape: f32[8,2], index: 2, kind: input, shape index: {}]
  %s3 = inlined_call_operand.vmem [shape: f32[2,8,256], index: 3, kind: output, shape index: {}]
  %s4 = sld [smem:[#allocation0]]
  $region22: #{basic_cell_forward.1} parent=0
    _
  %s6 = ssub.s32 1, %s4
  %s7 = scalar_select 0, %s6, %s4
  // Predicated region
  $region2: #{basic_cell_forward.1} parent=0 // pred_check
    _
  $region3: #{basic_cell_forward.1} parent=0 // pred_check_branch
    %9 = sbr.rel (0) target = $region5
  $region4: #{basic_cell_forward.1} parent=0 // pred_region
    _
  $region5: #{basic_cell_forward.1} parent=0 // pred_fallthru
    _
  // Predicated region
  $region6: #{basic_cell_forward.1} parent=0 // pred_check
    _
  $region7: #{basic_cell_forward.1} parent=0 // pred_check_branch
    %11 = sbr.rel (0) target = $region9
  $region8: #{basic_cell_forward.1} parent=0 // pred_region
    _
  $region9: #{basic_cell_forward.1} parent=0 // pred_fallthru
    _
  // Predicated region
  $region10: #{basic_cell_forward.1} parent=0 // pred_check
    _
  $region11: #{basic_cell_forward.1} parent=0 // pred_check_branch
    %13 = sbr.rel (0) target = $region13
  $region12: #{basic_cell_forward.1} parent=0 // pred_region
    _
  $region13: #{basic_cell_forward.1} parent=0 // pred_fallthru
    _
  %v14 = vld [vmem:[%s1] sm:$0xff]
  %v15 = vld [vmem:[%s0] sm:$0xff]
  %v16 = vld [vmem:[%s0 + $0x8] sm:$0xff]
  %v17 = vld [vmem:[%s0 + $0x10] sm:$0xff]
  %v18 = vld [vmem:[%s0 + $0x18] sm:$0xff]
  %v19 = vld [vmem:[%s0 + $0x20] sm:$0xff]
  %v20 = vld [vmem:[%s0 + $0x28] sm:$0xff]
  %v21 = vld [vmem:[%s0 + $0x30] sm:$0xff]
  %v22 = vld [vmem:[%s0 + $0x38] sm:$0xff]
  %v23 = vld [vmem:[%s0 + $0x40] sm:$0xff]
  %v24 = vld [vmem:[%s0 + $0x48] sm:$0xff]
  %v25 = vld [vmem:[%s0 + $0x50] sm:$0xff]
  %v26 = vld [vmem:[%s0 + $0x58] sm:$0xff]
  %v27 = vld [vmem:[%s0 + $0x60] sm:$0xff]
  %v28 = vld [vmem:[%s0 + $0x68] sm:$0xff]
  %v29 = vld [vmem:[%s0 + $0x70] sm:$0xff]
  %v30 = vld [vmem:[%s0 + $0x78] sm:$0xff]
  %v31 = vld [vmem:[%s0 + $0x80] sm:$0xf]
  %v32 = vld [vmem:[%s0 + $0x88] sm:$0xf]
  %v33 = vld [vmem:[%s0 + $0x90] sm:$0xf]
  %v34 = vld [vmem:[%s0 + $0x98] sm:$0xf]
  %vm35 = vcmask 293888
  %v37 = vsel %vm35, %v14, 0
  %vm39 = vcmask 1043456
  %v41 = vsel %vm39, %v31, 0
  %v44 = vsel %vm39, %v32, 0
  %v47 = vsel %vm39, %v33, 0
  %v50 = vsel %vm39, %v34, 0
  %52 = vmatprep.subr.mxu0 %v16
  %53 = vmatpush1.msra.mxu0 %v15
  %54 = vmatprep.subr.mxu0 %v20
  %55 = vmatpush1.msra.mxu0 %v19
  %56 = vmatprep.subr.mxu0 %v24
  %57 = vmatpush1.msra.mxu0 %v23
  %58 = vmatprep.subr.mxu0 %v28
  %59 = vmatpush1.msra.mxu0 %v27
  %60 = vmatprep.subr.mxu0 %v44
  %61 = vmatpush1.msra.mxu0 %v41
  %62 = vmatprep.subr.mxu0 0.0
  %63 = vmatpush1.msra.mxu0 0.0
  %64 = vmatprep.subr.mxu0 0.0
  %65 = vmatpush1.msra.mxu0 0.0
  %66 = vmatprep.subr.mxu0 0.0
  %67 = vmatpush1.msra.mxu0 0.0
  %68 = vmatprep.subr.mxu0 0.0
  %69 = vmatpush1.msra.mxu0 0.0
  %70 = vmatprep.subr.mxu0 0.0
  %71 = vmatpush1.msra.mxu0 0.0
  %72 = vmatprep.subr.mxu0 0.0
  %73 = vmatpush1.msra.mxu0 0.0
  %74 = vmatprep.subr.mxu0 0.0
  %75 = vmatpush1.msra.mxu0 0.0
  %76 = vmatprep.subr.mxu0 0.0
  %77 = vmatpush1.msra.mxu0 0.0
  %78 = vmatprep.subr.mxu0 0.0
  %79 = vmatpush1.msra.mxu0 0.0
  %80 = vmatprep.subr.mxu0 0.0
  %81 = vmatpush1.msra.mxu0 0.0
  %82 = vmatprep.subr.mxu0 0.0
  %83 = vmatpush1.msra.mxu0 0.0
  %84 = vmatprep.subr.mxu0 0.0
  %85 = vmatpush1.msra.mxu0 0.0
  %86 = vmatprep.subr.mxu0 0.0
  %87 = vmatpush1.msra.mxu0 0.0
  %88 = vmatprep.subr.mxu0 0.0
  %89 = vmatpush1.msra.mxu0 0.0
  %90 = vmatprep.subr.mxu0 0.0
  %91 = vmatpush1.msra.mxu0 0.0
  %92 = vmatprep.subr.mxu0 0.0
  %93 = vmatpush1.msra.mxu0 0.0
  %94 = vmatprep.subr.mxu0 0.0
  %95 = vmatpush1.msra.mxu0 0.0
  %96 = vmatprep.subr.mxu0 0.0
  %97 = vmatpush1.msra.mxu0 0.0
  %98 = vmatprep.subr.mxu0 0.0
  %99 = vmatpush1.msra.mxu0 0.0
  %100 = vmatprep.subr.mxu0 0.0
  %101 = vmatpush1.msra.mxu0 0.0
  %102 = vmatprep.subr.mxu0 0.0
  %103 = vmatpush1.msra.mxu0 0.0
  %104 = vmatprep.subr.mxu0 0.0
  %105 = vmatpush1.msra.mxu0 0.0
  %106 = vmatprep.subr.mxu0 0.0
  %107 = vmatpush1.msra.mxu0 0.0
  %108 = vmatprep.subr.mxu0 0.0
  %109 = vmatpush1.msra.mxu0 0.0
  %110 = vmatprep.subr.mxu0 0.0
  %111 = vmatpush1.msra.mxu0 0.0
  %112 = vmatprep.subr.mxu0 0.0
  %113 = vmatpush1.msra.mxu0 0.0
  %114 = vmatprep.subr.mxu0 0.0
  %115 = vmatpush1.msra.mxu0 0.0
  %116 = vmatprep.mubr.f32.mxu0 0.0
  %117 = vmatmul.mubr.f32.gmra.mrb[0].mxu0 %v37
  %v118 = vpop.f32.mrb[0].mxu0
  %v119 = vadd.f32 0.0, %v118
  %v120 = vpop.f32.mrb[0].mxu0
  %v121 = vadd.f32 0.0, %v120
  %122 = vdwg.mxu0
  %123 = vmatprep.subr.mxu0 %v18
  %124 = vmatpush1.msra.mxu0 %v17
  %125 = vmatprep.subr.mxu0 %v22
  %126 = vmatpush1.msra.mxu0 %v21
  %127 = vmatprep.subr.mxu0 %v26
  %128 = vmatpush1.msra.mxu0 %v25
  %129 = vmatprep.subr.mxu0 %v30
  %130 = vmatpush1.msra.mxu0 %v29
  %131 = vmatprep.subr.mxu0 %v50
  %132 = vmatpush1.msra.mxu0 %v47
  %133 = vmatprep.subr.mxu0 0.0
  %134 = vmatpush1.msra.mxu0 0.0
  %135 = vmatprep.subr.mxu0 0.0
  %136 = vmatpush1.msra.mxu0 0.0
  %137 = vmatprep.subr.mxu0 0.0
  %138 = vmatpush1.msra.mxu0 0.0
  %139 = vmatprep.subr.mxu0 0.0
  %140 = vmatpush1.msra.mxu0 0.0
  %141 = vmatprep.subr.mxu0 0.0
  %142 = vmatpush1.msra.mxu0 0.0
  %143 = vmatprep.subr.mxu0 0.0
  %144 = vmatpush1.msra.mxu0 0.0
  %145 = vmatprep.subr.mxu0 0.0
  %146 = vmatpush1.msra.mxu0 0.0
  %147 = vmatprep.subr.mxu0 0.0
  %148 = vmatpush1.msra.mxu0 0.0
  %149 = vmatprep.subr.mxu0 0.0
  %150 = vmatpush1.msra.mxu0 0.0
  %151 = vmatprep.subr.mxu0 0.0
  %152 = vmatpush1.msra.mxu0 0.0
  %153 = vmatprep.subr.mxu0 0.0
  %154 = vmatpush1.msra.mxu0 0.0
  %155 = vmatprep.subr.mxu0 0.0
  %156 = vmatpush1.msra.mxu0 0.0
  %157 = vmatprep.subr.mxu0 0.0
  %158 = vmatpush1.msra.mxu0 0.0
  %159 = vmatprep.subr.mxu0 0.0
  %160 = vmatpush1.msra.mxu0 0.0
  %161 = vmatprep.subr.mxu0 0.0
  %162 = vmatpush1.msra.mxu0 0.0
  %163 = vmatprep.subr.mxu0 0.0
  %164 = vmatpush1.msra.mxu0 0.0
  %165 = vmatprep.subr.mxu0 0.0
  %166 = vmatpush1.msra.mxu0 0.0
  %167 = vmatprep.subr.mxu0 0.0
  %168 = vmatpush1.msra.mxu0 0.0
  %169 = vmatprep.subr.mxu0 0.0
  %170 = vmatpush1.msra.mxu0 0.0
  %171 = vmatprep.subr.mxu0 0.0
  %172 = vmatpush1.msra.mxu0 0.0
  %173 = vmatprep.subr.mxu0 0.0
  %174 = vmatpush1.msra.mxu0 0.0
  %175 = vmatprep.subr.mxu0 0.0
  %176 = vmatpush1.msra.mxu0 0.0
  %177 = vmatprep.subr.mxu0 0.0
  %178 = vmatpush1.msra.mxu0 0.0
  %179 = vmatprep.subr.mxu0 0.0
  %180 = vmatpush1.msra.mxu0 0.0
  %181 = vmatprep.subr.mxu0 0.0
  %182 = vmatpush1.msra.mxu0 0.0
  %183 = vmatprep.subr.mxu0 0.0
  %184 = vmatpush1.msra.mxu0 0.0
  %185 = vmatprep.subr.mxu0 0.0
  %186 = vmatpush1.msra.mxu0 0.0
  %187 = vmatprep.mubr.f32.mxu0 0.0
  %188 = vmatmul.mubr.f32.gmra.mrb[0].mxu0 %v37
  %v189 = vpop.f32.mrb[0].mxu0
  %v190 = vadd.f32 0.0, %v189
  %v191 = vpop.f32.mrb[0].mxu0
  %v192 = vadd.f32 0.0, %v191
  %193 = vdwg.mxu0
  %v194 = vadd.f32 %v119, %v121
  %v195 = vadd.f32 %v194, %v190
  %v196 = vadd.f32 %v195, %v192
  %197 = vadd.xlane.f32.xlu0 %v196
  %v198 = vpop.xlane.xlu0 %197
  %v199 = vmul.f32 %v198, 0.001953125
  %v200 = vsub.f32 %v119, %v199
  %v201 = vsub.f32 %v121, %v199
  %v202 = vsub.f32 %v190, %v199
  %v203 = vsub.f32 %v192, %v199
  %v204 = vmul.f32 %v200, %v200
  %v205 = vmul.f32 %v201, %v201
  %v206 = vmul.f32 %v202, %v202
  %v207 = vmul.f32 %v203, %v203
  %v208 = vadd.f32 %v204, %v205
  %v209 = vadd.f32 %v208, %v206
  %v210 = vadd.f32 %v209, %v207
  %211 = vadd.xlane.f32.xlu0 %v210
  %v212 = vpop.xlane.xlu0 %211
  %v213 = vmul.f32 %v212, 0.001953125
  %v214 = vadd.f32 %v213, 1e-05
  %v215 = vrsqrt.pop %v214
  %v216 = vld [vmem:[%s2] sm:$0xff]
  %v217 = vmul.f32 %v216, %v215
  %219 = vset.pattern.permute.xlu0 0
  %220 = vperm.xlu0 %219, %v217
  %v221 = vpop.permute.xlu0 %220
  %v223 = vmul.f32 %v200, %v221
  %v224 = vmul.f32 %v201, %v221
  %v225 = vmul.f32 %v202, %v221
  %v226 = vmul.f32 %v203, %v221
  %228 = vset.pattern.permute.xlu0 1
  %229 = vperm.xlu0 %228, %v216
  %v230 = vpop.permute.xlu0 %229
  %v232 = vadd.f32 %v223, %v230
  %v233 = vadd.f32 %v224, %v230
  %v234 = vadd.f32 %v225, %v230
  %v235 = vadd.f32 %v226, %v230
  %v236 = vmax.f32 %v232, 0.0
  %v237 = vmax.f32 %v233, 0.0
  %v238 = vmax.f32 %v234, 0.0
  %v239 = vmax.f32 %v235, 0.0
  %240 = vst [vmem:[%s3] sm:$0xff] %v236
  %241 = vst [vmem:[%s3 + $0x8] sm:$0xff] %v237
  %s242 = scalar_lea.vmem %s3, 16
  %243 = vst [vmem:[%s242] sm:$0xff] %v238
  %244 = vst [vmem:[%s242 + $0x8] sm:$0xff] %v239
  // Predicated region
  $region14: #{basic_cell_forward.1} parent=0 // pred_check
    _
  $region15: #{basic_cell_forward.1} parent=0 // pred_check_branch
    %246 = sbr.rel (0) target = $region17
  $region16: #{basic_cell_forward.1} parent=0 // pred_region
    _
  $region17: #{basic_cell_forward.1} parent=0 // pred_fallthru
    _
  // Predicated region
  $region18: #{basic_cell_forward.1} parent=0 // pred_check
    _
  $region19: #{basic_cell_forward.1} parent=0 // pred_check_branch
    %248 = sbr.rel (0) target = $region21
  $region20: #{basic_cell_forward.1} parent=0 // pred_region
    _
  $region21: #{basic_cell_forward.1} parent=0 // pred_fallthru
    _

</llo_original>
